<compile_context>
chip_gen: v7x
topology: tpu7x:2x2x1
jax: 0.10.0
libtpu: 0.0.40
codegen_flags: <defaults>
</compile_context>

<pallas_src>
import math

import jax
import jax.numpy as jnp
from jax.experimental import pallas as pl
from jax.experimental.pallas import tpu as pltpu


def _channel_attention_kernel(x_ref, w1t_ref, w2t_ref, o_ref):
    # x_ref block: (Bt, C, HW) -- a batch-tile of flattened feature maps.
    bt = x_ref.shape[0]

    # --- global avg / max pooling over the spatial (lane) axis, accumulated in f32 ---
    x = x_ref[...].astype(jnp.float32)              # (Bt, C, HW)
    avg = jnp.mean(x, axis=-1)                      # (Bt, C)
    mx = jnp.max(x, axis=-1)                        # (Bt, C)

    # --- fused squeeze-excitation MLP: one (2*Bt, C) chain instead of two (C,1) chains ---
    p = jnp.concatenate([avg, mx], axis=0)          # (2*Bt, C)
    h = jnp.dot(p, w1t_ref[...], preferred_element_type=jnp.float32)   # (2*Bt, Cr)
    h = jnp.maximum(h, 0.0)                                            # ReLU
    z = jnp.dot(h, w2t_ref[...], preferred_element_type=jnp.float32)   # (2*Bt, C)
    scale = jax.nn.sigmoid(z[:bt] + z[bt:])         # (Bt, C) : avg-branch + max-branch

    # --- modulate: re-read the tile from VMEM so it is streamed (load -> scale -> store)
    # rather than held live in vregs across the MLP (avoids spills for large C*HW).
    o_ref[...] = (x_ref[...].astype(jnp.float32) * scale[:, :, None]).astype(o_ref.dtype)


def channel_attention(x_nchw, w1, w2, *, target_tile_bytes=2 << 20):
    """Channel attention forward.

    x_nchw: (B, C, H, W); w1: (C//ratio, C) [fc1 1x1-conv weight]; w2: (C, C//ratio) [fc2].
    """
    B, C, H, W = x_nchw.shape
    HW = H * W
    Cr = w1.shape[0]
    x_flat = x_nchw.reshape(B, C, HW)
    itemsize = x_flat.dtype.itemsize
    per_image = C * HW * itemsize

    # Batch tile: largest divisor of B whose block fits the byte budget, while keeping
    # at least 2 grid steps when B >= 2 so both TensorCores get work on v7x.
    max_bt = max(1, min(B, target_tile_bytes // max(per_image, 1)))
    if B >= 2:
        max_bt = min(max_bt, B // 2)
    bt = 1
    for d in range(1, B + 1):
        if B % d == 0 and d <= max_bt:
            bt = d
    grid_b = B // bt

    # Explicit VMEM budget: double-buffered input + output tiles + tiny weights + slack.
    tile_bytes = bt * per_image
    vmem_needed = 4 * tile_bytes + 8 * C * Cr * 4 + (1 << 20)
    vmem_limit = int(min(64 << 20, max(32 << 20, vmem_needed * 5 // 4)))

    # Pre-transpose the 1x1-conv weights once in the wrapper so the kernel needs no
    # in-kernel transposes: (C, Cr) and (Cr, C).
    w1t = jnp.asarray(w1, jnp.float32).T
    w2t = jnp.asarray(w2, jnp.float32).T

    out_flat = pl.pallas_call(
        _channel_attention_kernel,
        out_shape=jax.ShapeDtypeStruct((B, C, HW), x_flat.dtype),
        grid_spec=pltpu.PrefetchScalarGridSpec(
            num_scalar_prefetch=0,
            grid=(grid_b,),
            in_specs=[
                pl.BlockSpec((bt, C, HW), lambda b: (b, 0, 0)),
                pl.BlockSpec((C, Cr), lambda b: (0, 0)),
                pl.BlockSpec((Cr, C), lambda b: (0, 0)),
            ],
            out_specs=pl.BlockSpec((bt, C, HW), lambda b: (b, 0, 0)),
        ),
        # In-place channel scaling: alias the output onto x_flat (same shape/dtype)
        # to avoid allocating a second B*C*HW HBM buffer.
        input_output_aliases={0: 0},
        compiler_params=pltpu.CompilerParams(
            dimension_semantics=("parallel",),
            vmem_limit_bytes=vmem_limit,
        ),
    )(x_flat, w1t, w2t)
    # TODO(synk): for feature maps whose per-step tile exceeds ~12 MiB (v7x's 64 MiB VMEM),
    # switch to a two-phase HW-tiled grid (accumulate sum/max scratch, then re-read & scale).
    return out_flat.reshape(B, C, H, W)


def channel_attention_ref(x, w1, w2):
    # Pure-JAX reference mirroring the PyTorch forward.
    avg = jnp.mean(x, axis=(2, 3), keepdims=True)             # (B,C,1,1)
    mx = jnp.max(x, axis=(2, 3), keepdims=True)               # (B,C,1,1)

    def mlp(p):
        h = jnp.einsum('oc,bcij->boij', w1, p)
        h = jnp.maximum(h, 0.0)
        return jnp.einsum('co,boij->bcij', w2, h)

    out = mlp(avg) + mlp(mx)
    return x * jax.nn.sigmoid(out)


if __name__ == "__main__":
    ratio = 16

    def run_case(key, B, C, H, W):
        Cr = C // ratio
        kx, k1, k2 = jax.random.split(key, 3)
        x = jax.random.normal(kx, (B, C, H, W), dtype=jnp.float32)
        # Conv2d(in, out, 1, bias=False) weights are (out, in, 1, 1); squeeze to (out, in).
        bound1 = 1.0 / math.sqrt(C)
        bound2 = 1.0 / math.sqrt(Cr)
        w1 = jax.random.uniform(k1, (Cr, C), jnp.float32, -bound1, bound1)
        w2 = jax.random.uniform(k2, (C, Cr), jnp.float32, -bound2, bound2)

        # Reference computed first (kernel output aliases its own flattened input copy).
        ref = channel_attention_ref(x, w1, w2)
        out = jax.block_until_ready(channel_attention(x, w1, w2))
        assert out.shape == x.shape
        assert jnp.allclose(out, ref, atol=1e-5, rtol=1e-5), "mismatch vs reference"

    key = jax.random.PRNGKey(0)
    k0, k1 = jax.random.split(key)
    run_case(k0, B=2, C=64, H=16, W=16)   # bt=1, grid=(2,)
    run_case(k1, B=8, C=64, H=8, W=8)     # bt=4, grid=(2,) -- exercises the batched path

    print("KERNEL_OK")
</pallas_src>

<mosaic_0001>
module attributes {stable_mosaic.version = 11 : i64} {
  func.func @_channel_attention_kernel(%arg0: i32, %arg1: memref<1x64x256xf32, #tpu.memory_space<vmem>>, %arg2: memref<64x4xf32, #tpu.memory_space<vmem>>, %arg3: memref<4x64xf32, #tpu.memory_space<vmem>>, %arg4: memref<1x64x256xf32, #tpu.memory_space<vmem>>) attributes {dimension_semantics = [#tpu.dimension_semantics<parallel>], iteration_bounds = array<i64: 2>, scalar_prefetch = 0 : i64, scratch_operands = 0 : i64, tpu.core_type = #tpu.core_type<tc>, window_params = [{transform_indices = @transform_0, window_bounds = array<i64: 1, 64, 256>}, {pipeline_mode = #tpu.pipeline_mode<synchronous>, transform_indices = @transform_1, window_bounds = array<i64: 64, 4>}, {pipeline_mode = #tpu.pipeline_mode<synchronous>, transform_indices = @transform_2, window_bounds = array<i64: 4, 64>}, {transform_indices = @transform_3, window_bounds = array<i64: 1, 64, 256>}]} {
    %c0 = arith.constant 0 : index
    %c0_0 = arith.constant 0 : index
    %c0_1 = arith.constant 0 : index
    %0 = vector.load %arg1[%c0, %c0_0, %c0_1] : memref<1x64x256xf32, #tpu.memory_space<vmem>>, vector<1x64x256xf32>
    %cst = arith.constant dense<0.000000e+00> : vector<1x64xf32>
    %1 = vector.multi_reduction <add>, %0, %cst [2] : vector<1x64x256xf32> to vector<1x64xf32>
    %cst_2 = arith.constant 2.560000e+02 : f32
    %2 = vector.broadcast %cst_2 : f32 to vector<1x64xf32>
    %3 = arith.divf %1, %2 : vector<1x64xf32>
    %cst_3 = arith.constant dense<0xFF800000> : vector<1x64xf32>
    %4 = vector.multi_reduction <maximumf>, %0, %cst_3 [2] : vector<1x64x256xf32> to vector<1x64xf32>
    %5 = tpu.concatenate %3, %4 in 0 : vector<1x64xf32>, vector<1x64xf32> -> vector<2x64xf32>
    %c0_4 = arith.constant 0 : index
    %c0_5 = arith.constant 0 : index
    %6 = vector.load %arg2[%c0_4, %c0_5] : memref<64x4xf32, #tpu.memory_space<vmem>>, vector<64x4xf32>
    %cst_6 = arith.constant dense<0.000000e+00> : vector<2x4xf32>
    %7 = tpu.matmul %5, %6, %cst_6 {dimension_numbers = #tpu.dot_dimension_numbers<[1], [0], [0], [1], [0, 0, 1, 1], [], []>} : vector<2x64xf32>, vector<64x4xf32>, vector<2x4xf32> -> vector<2x4xf32>
    %cst_7 = arith.constant 0.000000e+00 : f32
    %8 = vector.broadcast %cst_7 : f32 to vector<2x4xf32>
    %9 = arith.maximumf %7, %8 : vector<2x4xf32>
    %c0_8 = arith.constant 0 : index
    %c0_9 = arith.constant 0 : index
    %10 = vector.load %arg3[%c0_8, %c0_9] : memref<4x64xf32, #tpu.memory_space<vmem>>, vector<4x64xf32>
    %cst_10 = arith.constant dense<0.000000e+00> : vector<2x64xf32>
    %11 = tpu.matmul %9, %10, %cst_10 {dimension_numbers = #tpu.dot_dimension_numbers<[1], [0], [0], [1], [0, 0, 1, 1], [], []>} : vector<2x4xf32>, vector<4x64xf32>, vector<2x64xf32> -> vector<2x64xf32>
    %12 = vector.extract_strided_slice %11 {offsets = [0, 0], sizes = [1, 64], strides = [1, 1]} : vector<2x64xf32> to vector<1x64xf32>
    %13 = vector.extract_strided_slice %11 {offsets = [1, 0], sizes = [1, 64], strides = [1, 1]} : vector<2x64xf32> to vector<1x64xf32>
    %14 = arith.addf %12, %13 : vector<1x64xf32>
    %15 = arith.negf %14 : vector<1x64xf32>
    %16 = math.exp %15 : vector<1x64xf32>
    %cst_11 = arith.constant 1.000000e+00 : f32
    %17 = vector.broadcast %cst_11 : f32 to vector<1x64xf32>
    %18 = arith.addf %17, %16 : vector<1x64xf32>
    %19 = arith.divf %17, %18 : vector<1x64xf32>
    %c0_12 = arith.constant 0 : index
    %c0_13 = arith.constant 0 : index
    %c0_14 = arith.constant 0 : index
    %20 = vector.load %arg1[%c0_12, %c0_13, %c0_14] : memref<1x64x256xf32, #tpu.memory_space<vmem>>, vector<1x64x256xf32>
    %21 = vector.shape_cast %19 : vector<1x64xf32> to vector<1x64x1xf32>
    %22 = vector.broadcast %21 : vector<1x64x1xf32> to vector<1x64x256xf32>
    %23 = arith.mulf %20, %22 : vector<1x64x256xf32>
    %c0_15 = arith.constant 0 : index
    %c0_16 = arith.constant 0 : index
    %c0_17 = arith.constant 0 : index
    %24 = vector.load %arg4[%c0_15, %c0_16, %c0_17] : memref<1x64x256xf32, #tpu.memory_space<vmem>>, vector<1x64x256xf32>
    tpu.vector_store %arg4[%c0_15, %c0_16, %c0_17], %23 {strides = array<i32>} : memref<1x64x256xf32, #tpu.memory_space<vmem>>, vector<1x64x256xf32>,
    return
  }
  func.func @transform_0(%arg0: i32) -> (i32, i32, i32) {
    %c0_i32 = arith.constant 0 : i32
    %c0_i32_0 = arith.constant 0 : i32
    %c0_i32_1 = arith.constant 0 : i32
    return %arg0, %c0_i32, %c0_i32_0 : i32, i32, i32
  }
  func.func @transform_1(%arg0: i32) -> (i32, i32) {
    %c0_i32 = arith.constant 0 : i32
    %c0_i32_0 = arith.constant 0 : i32
    %c0_i32_1 = arith.constant 0 : i32
    return %c0_i32, %c0_i32_0 : i32, i32
  }
  func.func @transform_2(%arg0: i32) -> (i32, i32) {
    %c0_i32 = arith.constant 0 : i32
    %c0_i32_0 = arith.constant 0 : i32
    %c0_i32_1 = arith.constant 0 : i32
    return %c0_i32, %c0_i32_0 : i32, i32
  }
  func.func @transform_3(%arg0: i32) -> (i32, i32, i32) {
    %c0_i32 = arith.constant 0 : i32
    %c0_i32_0 = arith.constant 0 : i32
    %c0_i32_1 = arith.constant 0 : i32
    return %arg0, %c0_i32, %c0_i32_0 : i32, i32, i32
  }
}

</mosaic_0001>

<llo_original>
// kernel: tpu_custom_call.1
$region0: #{tpu_custom_call.1}
  #allocation0 [shape = 'u32[]', space=smem, size = 0x4, offset = 0x4, fixed_abs, tag = 'smem constant byte address 0x4 - core index']
  #allocation1 [shape = 'u32[144,128]{1,0:T(1,128)}', space=vmem, size = 0x12000, scoped, tag = 'internal scratch']
  %s0 = inlined_call_operand.hbm [shape: f32[2,64,256], index: 0, kind: input, shape index: {}, may-alias: {0,3}]
  %s1 = inlined_call_operand.vmem [shape: f32[64,4], index: 1, kind: input, shape index: {}]
  %s2 = inlined_call_operand.vmem [shape: f32[4,64], index: 2, kind: input, shape index: {}]
  %s3 = inlined_call_operand.hbm [shape: f32[2,64,256], index: 3, kind: output, shape index: {}, may-alias: {0,3}]
  %s4 = sld [smem:[#allocation0]]
  $region49: #{tpu_custom_call.1} parent=0
    _
  %s6 = ssub.s32 1, %s4
  %s7 = scalar_select 0, %s6, %s4
  $region1: #{tpu_custom_call.1} parent=0
    #allocation2 [shape = 'u8[131072]{0}', space=vmem, size = 0x20000, scoped, tag = 'input window, operand 0']
    #allocation3 [shape = 's32[2]{0}', space=sflag, size = 0x8, scoped, tag = 'scoped memory for tpu_custom_call.1']
    #allocation4 [shape = 's32[2]{0}', space=sflag, size = 0x8, scoped, tag = 'scoped memory for tpu_custom_call.1']
    #allocation5 [shape = 'u8[131072]{0}', space=vmem, size = 0x20000, scoped, tag = 'output window, operand 0']
    %8 = vsyncpa [#allocation3], 0
    %s9 = scalar_lea.sflag [#allocation3], 1
    %10 = vsyncpa %s9, 0
    %11 = vsyncpa [#allocation4], 0
    %s12 = scalar_lea.sflag [#allocation4], 1
    %13 = vsyncpa %s12, 0
    loop: start=0, step=1, limit=4
    $region2: #{tpu_custom_call.1} parent=1 // loop_pre_header
      _
    $region3: #{tpu_custom_call.1} parent=1 // loop_header
      %s15 = sphi 0, %s19
      %p16 = scmp.ge.s32.totalorder %s15, 4
      %s25 = sphi 0, %s27
      %s28 = sphi 0, %s25
      %s29 = sphi 0, %s28
      %s45 = sphi 0, %s29
      %s49 = sphi 0, %s49
      %s51 = sphi 0, %s49
      %s52 = sphi 0, %s51
      %s66 = sphi 0, %s52
      %s70 = sphi 0, %s70
      %s72 = sphi 0, %s70
      %s73 = sphi 0, %s72
      %s87 = sphi 0, %s73
      %s93 = sphi 0, %s95
      %s96 = sphi 0, %s93
      %s97 = sphi 0, %s96
      %s113 = sphi 0, %s97
    $region4: #{tpu_custom_call.1} parent=1 // loop_header_branch
      %18 = sbr.rel (%p16) target = $region8
    $region5: #{tpu_custom_call.1} parent=1 // loop_body
      %s20 = ssub.s32 %s15, 1
      %s21 = ssub.s32 %s15, 2
      %s22 = sadd.s32 %s15, 1
      %s23 = ssub.s32 %s15, %s22
      %p24 = scmp.eq.s32.totalorder %s23, 0
      %s26 = sadd.s32 %s25, 1
      %s27 = scalar_select %p24, %s25, %s26
      %p30 = pneg %p24
      %p31 = scmp.eq.s32.totalorder %s15, 1
      %p32 = por %p30, %p31
      %p33 = scmp.ne.s32.totalorder %s25, %s28
      %p34 = scmp.eq.s32.totalorder %s15, 0
      %p35 = por %p33, %p34
      %p36 = scmp.ne.s32.totalorder %s25, %s28
      %p37 = scmp.eq.s32.totalorder %s20, 1
      %p38 = por %p36, %p37
      %p39 = scmp.ne.s32.totalorder %s28, %s29
      %p40 = scmp.eq.s32.totalorder %s20, 0
      %p41 = por %p39, %p40
      %p42 = scmp.ne.s32.totalorder %s28, %s29
      %p43 = scmp.eq.s32.totalorder %s21, 1
      %p44 = por %p42, %p43
      %p46 = scmp.ne.s32.totalorder %s29, %s45
      %p47 = scmp.eq.s32.totalorder %s21, 0
      %p48 = por %p46, %p47
      %s50 = sadd.s32 %s49, 1
      %p53 = scmp.eq.s32.totalorder %s15, 1
      %p54 = scmp.ne.s32.totalorder %s49, %s51
      %p55 = scmp.eq.s32.totalorder %s15, 0
      %p56 = por %p54, %p55
      %p57 = scmp.ne.s32.totalorder %s49, %s51
      %p58 = scmp.eq.s32.totalorder %s20, 1
      %p59 = por %p57, %p58
      %p60 = scmp.ne.s32.totalorder %s51, %s52
      %p61 = scmp.eq.s32.totalorder %s20, 0
      %p62 = por %p60, %p61
      %p63 = scmp.ne.s32.totalorder %s51, %s52
      %p64 = scmp.eq.s32.totalorder %s21, 1
      %p65 = por %p63, %p64
      %p67 = scmp.ne.s32.totalorder %s52, %s66
      %p68 = scmp.eq.s32.totalorder %s21, 0
      %p69 = por %p67, %p68
      %s71 = sadd.s32 %s70, 1
      %p74 = scmp.eq.s32.totalorder %s15, 1
      %p75 = scmp.ne.s32.totalorder %s70, %s72
      %p76 = scmp.eq.s32.totalorder %s15, 0
      %p77 = por %p75, %p76
      %p78 = scmp.ne.s32.totalorder %s70, %s72
      %p79 = scmp.eq.s32.totalorder %s20, 1
      %p80 = por %p78, %p79
      %p81 = scmp.ne.s32.totalorder %s72, %s73
      %p82 = scmp.eq.s32.totalorder %s20, 0
      %p83 = por %p81, %p82
      %p84 = scmp.ne.s32.totalorder %s72, %s73
      %p85 = scmp.eq.s32.totalorder %s21, 1
      %p86 = por %p84, %p85
      %p88 = scmp.ne.s32.totalorder %s73, %s87
      %p89 = scmp.eq.s32.totalorder %s21, 0
      %p90 = por %p88, %p89
      %s91 = ssub.s32 %s15, %s22
      %p92 = scmp.eq.s32.totalorder %s91, 0
      %s94 = sadd.s32 %s93, 1
      %s95 = scalar_select %p92, %s93, %s94
      %p98 = pneg %p92
      %p99 = scmp.eq.s32.totalorder %s15, 1
      %p100 = por %p98, %p99
      %p101 = scmp.ne.s32.totalorder %s93, %s96
      %p102 = scmp.eq.s32.totalorder %s15, 0
      %p103 = por %p101, %p102
      %p104 = scmp.ne.s32.totalorder %s93, %s96
      %p105 = scmp.eq.s32.totalorder %s20, 1
      %p106 = por %p104, %p105
      %p107 = scmp.ne.s32.totalorder %s96, %s97
      %p108 = scmp.eq.s32.totalorder %s20, 0
      %p109 = por %p107, %p108
      %p110 = scmp.ne.s32.totalorder %s96, %s97
      %p111 = scmp.eq.s32.totalorder %s21, 1
      %p112 = por %p110, %p111
      %p114 = scmp.ne.s32.totalorder %s97, %s113
      %p115 = scmp.eq.s32.totalorder %s21, 0
      %p116 = por %p114, %p115
      %p117 = scmp.le.s32.totalorder 1, %s15
      %p118 = scmp.lt.s32.totalorder %s15, 3
      %p119 = pnand %p117, %p118
      %p120 = pneg %p119
      // Predicated region
      $region9: #{tpu_custom_call.1} parent=5 // pred_check
        _
      $region10: #{tpu_custom_call.1} parent=5 // pred_check_branch
        %122 = sbr.rel (%p119) target = $region12
      $region11: #{tpu_custom_call.1} parent=5 // pred_region
        %s123 = ssub.s32 %s15, 1
        // Predicated region
        $region13: #{tpu_custom_call.1} parent=11 // pred_check
          %p124 = pneg %p62
        $region14: #{tpu_custom_call.1} parent=11 // pred_check_branch
          %126 = sbr.rel (%p124) target = $region16
        $region15: #{tpu_custom_call.1} parent=11 // pred_region
          _
        $region16: #{tpu_custom_call.1} parent=11 // pred_fallthru
          _
        // Predicated region
        $region17: #{tpu_custom_call.1} parent=11 // pred_check
          %p127 = pneg %p83
        $region18: #{tpu_custom_call.1} parent=11 // pred_check_branch
          %129 = sbr.rel (%p127) target = $region20
        $region19: #{tpu_custom_call.1} parent=11 // pred_region
          _
        $region20: #{tpu_custom_call.1} parent=11 // pred_fallthru
          _
      $region12: #{tpu_custom_call.1} parent=5 // pred_fallthru
        _
      %p130 = scmp.lt.s32.totalorder %s15, 2
      // Predicated region
      $region21: #{tpu_custom_call.1} parent=5 // pred_check
        %p131 = pneg %p130
      $region22: #{tpu_custom_call.1} parent=5 // pred_check_branch
        %133 = sbr.rel (%p131) target = $region24
      $region23: #{tpu_custom_call.1} parent=5 // pred_region
        // Predicated region
        $region25: #{tpu_custom_call.1} parent=23 // pred_check
          %p134 = pneg %p35
        $region26: #{tpu_custom_call.1} parent=23 // pred_check_branch
          %136 = sbr.rel (%p134) target = $region28
        $region27: #{tpu_custom_call.1} parent=23 // pred_region
          %s137 = sand.u32 %s25, 1
          %s138 = scalar_lea.sflag [#allocation3], %s137
          %s139 = sand.u32 %s25, 1
          %s140 = smul.addr %s139, 128
          %s141 = scalar_lea.vmem [#allocation2], %s140
          %s143 = ssub.s32 2048, 2048
          %144 = vsyncadd %s138, %s143
          %s145 = smul.addr %s15, 16
          %s146 = smul.addr %s145, 128
          %s147 = scalar_lea.hbm %s0, %s146
          %s148 = sshll.u32 %s141, 4
          %s149 = int_to_ptr.vmem [resolvable:$true] %s148
          %154 = dma.hbm_to_vmem [thread:$0]  %s147, 2048, %s149, %s138, 256, 256, 16
        $region28: #{tpu_custom_call.1} parent=23 // pred_fallthru
          _
      $region24: #{tpu_custom_call.1} parent=5 // pred_fallthru
        _
      %p155 = scmp.le.s32.totalorder 1, %s15
      %p156 = scmp.lt.s32.totalorder %s15, 3
      %p157 = pnand %p155, %p156
      %p158 = pneg %p157
      // Predicated region
      $region29: #{tpu_custom_call.1} parent=5 // pred_check
        _
      $region30: #{tpu_custom_call.1} parent=5 // pred_check_branch
        %160 = sbr.rel (%p157) target = $region32
      $region31: #{tpu_custom_call.1} parent=5 // pred_region
        %s161 = ssub.s32 %s15, 1
        %s162 = sand.u32 %s28, 1
        %s163 = scalar_lea.sflag [#allocation3], %s162
        %s164 = sand.u32 %s28, 1
        %s165 = smul.addr %s164, 128
        %s166 = scalar_lea.vmem [#allocation2], %s165
        // Predicated region
        $region33: #{tpu_custom_call.1} parent=31 // pred_check
          %p167 = pneg %p41
        $region34: #{tpu_custom_call.1} parent=31 // pred_check_branch
          %169 = sbr.rel (%p167) target = $region36
        $region35: #{tpu_custom_call.1} parent=31 // pred_region
          %170 = dma.done %s163, 2048
        $region36: #{tpu_custom_call.1} parent=31 // pred_fallthru
          _
        %s171 = sand.u32 %s28, 1
        %s172 = scalar_lea.sflag [#allocation3], %s171
        %s173 = sand.u32 %s28, 1
        %s174 = smul.addr %s173, 128
        %s175 = scalar_lea.vmem [#allocation2], %s174
        %p176 = pneg %p41
        %p177 = pneg %p38
        %p178 = pneg %p62
        %p179 = pneg %p59
        %p180 = pneg %p83
        %p181 = pneg %p80
        %p182 = pneg %p109
        %p183 = pneg %p106
        %s184 = sand.u32 %s96, 1
        %s185 = scalar_lea.sflag [#allocation4], %s184
        %s186 = sand.u32 %s96, 1
        %s187 = smul.addr %s186, 128
        %s188 = scalar_lea.vmem [#allocation5], %s187
        %v189 = vld [vmem:[%s166] sm:$0xff]
        %v190 = vld [vmem:[%s166 + $0x8] sm:$0xff]
        %v191 = vld [vmem:[%s166 + $0x10] sm:$0xff]
        %v192 = vld [vmem:[%s166 + $0x18] sm:$0xff]
        %v193 = vld [vmem:[%s166 + $0x20] sm:$0xff]
        %v194 = vld [vmem:[%s166 + $0x28] sm:$0xff]
        %v195 = vld [vmem:[%s166 + $0x30] sm:$0xff]
        %v196 = vld [vmem:[%s166 + $0x38] sm:$0xff]
        %v197 = vld [vmem:[%s166 + $0x40] sm:$0xff]
        %v198 = vld [vmem:[%s166 + $0x48] sm:$0xff]
        %v199 = vld [vmem:[%s166 + $0x50] sm:$0xff]
        %v200 = vld [vmem:[%s166 + $0x58] sm:$0xff]
        %v201 = vld [vmem:[%s166 + $0x60] sm:$0xff]
        %v202 = vld [vmem:[%s166 + $0x68] sm:$0xff]
        %v203 = vld [vmem:[%s166 + $0x70] sm:$0xff]
        %v204 = vld [vmem:[%s166 + $0x78] sm:$0xff]
        %v205 = vadd.f32 %v189, %v190
        %206 = vadd.xlane.f32.xlu0 %v205
        %v207 = vpop.xlane.xlu0 %206
        %v208 = vadd.f32 %v191, %v192
        %209 = vadd.xlane.f32.xlu0 %v208
        %v210 = vpop.xlane.xlu0 %209
        %v211 = vadd.f32 %v193, %v194
        %212 = vadd.xlane.f32.xlu0 %v211
        %v213 = vpop.xlane.xlu0 %212
        %v214 = vadd.f32 %v195, %v196
        %215 = vadd.xlane.f32.xlu0 %v214
        %v216 = vpop.xlane.xlu0 %215
        %v217 = vadd.f32 %v197, %v198
        %218 = vadd.xlane.f32.xlu0 %v217
        %v219 = vpop.xlane.xlu0 %218
        %v220 = vadd.f32 %v199, %v200
        %221 = vadd.xlane.f32.xlu0 %v220
        %v222 = vpop.xlane.xlu0 %221
        %v223 = vadd.f32 %v201, %v202
        %224 = vadd.xlane.f32.xlu0 %v223
        %v225 = vpop.xlane.xlu0 %224
        %v226 = vadd.f32 %v203, %v204
        %227 = vadd.xlane.f32.xlu0 %v226
        %v228 = vpop.xlane.xlu0 %227
        %v229 = vrcp.pop 256.0
        %v230 = vmul.f32 %v207, %v229
        %v231 = vmul.f32 %v210, %v229
        %v232 = vmul.f32 %v213, %v229
        %v233 = vmul.f32 %v216, %v229
        %v234 = vmul.f32 %v219, %v229
        %v235 = vmul.f32 %v222, %v229
        %v236 = vmul.f32 %v225, %v229
        %v237 = vmul.f32 %v228, %v229
        %v238 = vmax.f32 %v189, %v190
        %239 = vmax.xlane.f32.xlu0 %v238
        %v240 = vpop.xlane.xlu0 %239
        %v241 = vmax.f32 %v191, %v192
        %242 = vmax.xlane.f32.xlu0 %v241
        %v243 = vpop.xlane.xlu0 %242
        %v244 = vmax.f32 %v193, %v194
        %245 = vmax.xlane.f32.xlu0 %v244
        %v246 = vpop.xlane.xlu0 %245
        %v247 = vmax.f32 %v195, %v196
        %248 = vmax.xlane.f32.xlu0 %v247
        %v249 = vpop.xlane.xlu0 %248
        %v250 = vmax.f32 %v197, %v198
        %251 = vmax.xlane.f32.xlu0 %v250
        %v252 = vpop.xlane.xlu0 %251
        %v253 = vmax.f32 %v199, %v200
        %254 = vmax.xlane.f32.xlu0 %v253
        %v255 = vpop.xlane.xlu0 %254
        %v256 = vmax.f32 %v201, %v202
        %257 = vmax.xlane.f32.xlu0 %v256
        %v258 = vpop.xlane.xlu0 %257
        %v259 = vmax.f32 %v203, %v204
        %260 = vmax.xlane.f32.xlu0 %v259
        %v261 = vpop.xlane.xlu0 %260
        %v270 = vlaneseq
        %v271 = vand.u32 %v270, 127
        %v272 = vlaneseq
        %v273 = vshrl.u32 %v272, 7
        %v274 = vsub.s32 %v271, %v273
        %v275 = vrot.slane %v230, %v274
        %v276 = vadd.s32 %v271, 4294967288
        %v277 = vlaneseq
        %v278 = vshrl.u32 %v277, 7
        %v279 = vsub.s32 %v276, %v278
        %v280 = vrot.slane %v231, %v279
        %vm281 = vcmask 130112
        %v282 = vsel %vm281, %v280, %v275
        %v283 = vadd.s32 %v271, 4294967280
        %v284 = vlaneseq
        %v285 = vshrl.u32 %v284, 7
        %v286 = vsub.s32 %v283, %v285
        %v287 = vrot.slane %v232, %v286
        %vm288 = vcmask 195712
        %v289 = vsel %vm288, %v287, %v282
        %v290 = vadd.s32 %v271, 4294967272
        %v291 = vlaneseq
        %v292 = vshrl.u32 %v291, 7
        %v293 = vsub.s32 %v290, %v292
        %v294 = vrot.slane %v233, %v293
        %vm295 = vcmask 261312
        %v296 = vsel %vm295, %v294, %v289
        %v297 = vadd.s32 %v271, 4294967264
        %v298 = vlaneseq
        %v299 = vshrl.u32 %v298, 7
        %v300 = vsub.s32 %v297, %v299
        %v301 = vrot.slane %v234, %v300
        %vm302 = vcmask 326912
        %v303 = vsel %vm302, %v301, %v296
        %v304 = vadd.s32 %v271, 4294967256
        %v305 = vlaneseq
        %v306 = vshrl.u32 %v305, 7
        %v307 = vsub.s32 %v304, %v306
        %v308 = vrot.slane %v235, %v307
        %vm309 = vcmask 392512
        %v310 = vsel %vm309, %v308, %v303
        %v311 = vadd.s32 %v271, 4294967248
        %v312 = vlaneseq
        %v313 = vshrl.u32 %v312, 7
        %v314 = vsub.s32 %v311, %v313
        %v315 = vrot.slane %v236, %v314
        %vm316 = vcmask 458112
        %v317 = vsel %vm316, %v315, %v310
        %v318 = vadd.s32 %v271, 4294967240
        %v319 = vlaneseq
        %v320 = vshrl.u32 %v319, 7
        %v321 = vsub.s32 %v318, %v320
        %v322 = vrot.slane %v237, %v321
        %vm323 = vcmask 523712
        %v324 = vsel %vm323, %v322, %v317
        %v334 = vlaneseq
        %v335 = vshrl.u32 %v334, 7
        %v336 = vsub.s32 %v271, %v335
        %v337 = vrot.slane %v240, %v336
        %v338 = vlaneseq
        %v339 = vshrl.u32 %v338, 7
        %v340 = vsub.s32 %v276, %v339
        %v341 = vrot.slane %v243, %v340
        %v342 = vsel %vm281, %v341, %v337
        %v343 = vlaneseq
        %v344 = vshrl.u32 %v343, 7
        %v345 = vsub.s32 %v283, %v344
        %v346 = vrot.slane %v246, %v345
        %v347 = vsel %vm288, %v346, %v342
        %v348 = vlaneseq
        %v349 = vshrl.u32 %v348, 7
        %v350 = vsub.s32 %v290, %v349
        %v351 = vrot.slane %v249, %v350
        %v352 = vsel %vm295, %v351, %v347
        %v353 = vlaneseq
        %v354 = vshrl.u32 %v353, 7
        %v355 = vsub.s32 %v297, %v354
        %v356 = vrot.slane %v252, %v355
        %v357 = vsel %vm302, %v356, %v352
        %v358 = vlaneseq
        %v359 = vshrl.u32 %v358, 7
        %v360 = vsub.s32 %v304, %v359
        %v361 = vrot.slane %v255, %v360
        %v362 = vsel %vm309, %v361, %v357
        %v363 = vlaneseq
        %v364 = vshrl.u32 %v363, 7
        %v365 = vsub.s32 %v311, %v364
        %v366 = vrot.slane %v258, %v365
        %v367 = vsel %vm316, %v366, %v362
        %v368 = vlaneseq
        %v369 = vshrl.u32 %v368, 7
        %v370 = vsub.s32 %v318, %v369
        %v371 = vrot.slane %v261, %v370
        %v372 = vsel %vm323, %v371, %v367
        %vm374 = vcmask 1040384
        %v375 = vsel %vm374, %v324, %v372
        %v376 = vld [vmem:[%s1] sm:$0xff]
        %v377 = vld [vmem:[%s1 + $0x8] sm:$0xff]
        %v378 = vld [vmem:[%s1 + $0x10] sm:$0xff]
        %v379 = vld [vmem:[%s1 + $0x18] sm:$0xff]
        %v380 = vld [vmem:[%s1 + $0x20] sm:$0xff]
        %v381 = vld [vmem:[%s1 + $0x28] sm:$0xff]
        %v382 = vld [vmem:[%s1 + $0x30] sm:$0xff]
        %v383 = vld [vmem:[%s1 + $0x38] sm:$0xff]
        %vm384 = vcmask 523264
        %v386 = vsel %vm384, %v375, 0
        %388 = vmatprep.subr.mxu0 0.0
        %389 = vmatpush1.msra.mxu0 %v376
        %390 = vmatprep.subr.mxu0 0.0
        %391 = vmatpush1.msra.mxu0 %v377
        %392 = vmatprep.subr.mxu0 0.0
        %393 = vmatpush1.msra.mxu0 %v378
        %394 = vmatprep.subr.mxu0 0.0
        %395 = vmatpush1.msra.mxu0 %v379
        %396 = vmatprep.subr.mxu0 0.0
        %397 = vmatpush1.msra.mxu0 %v380
        %398 = vmatprep.subr.mxu0 0.0
        %399 = vmatpush1.msra.mxu0 %v381
        %400 = vmatprep.subr.mxu0 0.0
        %401 = vmatpush1.msra.mxu0 %v382
        %402 = vmatprep.subr.mxu0 0.0
        %403 = vmatpush1.msra.mxu0 %v383
        %404 = vmatprep.subr.mxu0 0.0
        %405 = vmatpush1.msra.mxu0 0.0
        %406 = vmatprep.subr.mxu0 0.0
        %407 = vmatpush1.msra.mxu0 0.0
        %408 = vmatprep.subr.mxu0 0.0
        %409 = vmatpush1.msra.mxu0 0.0
        %410 = vmatprep.subr.mxu0 0.0
        %411 = vmatpush1.msra.mxu0 0.0
        %412 = vmatprep.subr.mxu0 0.0
        %413 = vmatpush1.msra.mxu0 0.0
        %414 = vmatprep.subr.mxu0 0.0
        %415 = vmatpush1.msra.mxu0 0.0
        %416 = vmatprep.subr.mxu0 0.0
        %417 = vmatpush1.msra.mxu0 0.0
        %418 = vmatprep.subr.mxu0 0.0
        %419 = vmatpush1.msra.mxu0 0.0
        %420 = vmatprep.subr.mxu0 0.0
        %421 = vmatpush1.msra.mxu0 0.0
        %422 = vmatprep.subr.mxu0 0.0
        %423 = vmatpush1.msra.mxu0 0.0
        %424 = vmatprep.subr.mxu0 0.0
        %425 = vmatpush1.msra.mxu0 0.0
        %426 = vmatprep.subr.mxu0 0.0
        %427 = vmatpush1.msra.mxu0 0.0
        %428 = vmatprep.subr.mxu0 0.0
        %429 = vmatpush1.msra.mxu0 0.0
        %430 = vmatprep.subr.mxu0 0.0
        %431 = vmatpush1.msra.mxu0 0.0
        %432 = vmatprep.subr.mxu0 0.0
        %433 = vmatpush1.msra.mxu0 0.0
        %434 = vmatprep.subr.mxu0 0.0
        %435 = vmatpush1.msra.mxu0 0.0
        %436 = vmatprep.subr.mxu0 0.0
        %437 = vmatpush1.msra.mxu0 0.0
        %438 = vmatprep.subr.mxu0 0.0
        %439 = vmatpush1.msra.mxu0 0.0
        %440 = vmatprep.subr.mxu0 0.0
        %441 = vmatpush1.msra.mxu0 0.0
        %442 = vmatprep.subr.mxu0 0.0
        %443 = vmatpush1.msra.mxu0 0.0
        %444 = vmatprep.subr.mxu0 0.0
        %445 = vmatpush1.msra.mxu0 0.0
        %446 = vmatprep.subr.mxu0 0.0
        %447 = vmatpush1.msra.mxu0 0.0
        %448 = vmatprep.subr.mxu0 0.0
        %449 = vmatpush1.msra.mxu0 0.0
        %450 = vmatprep.subr.mxu0 0.0
        %451 = vmatpush1.msra.mxu0 0.0
        %452 = vmatprep.mubr.f32.mxu0 0.0
        %453 = vmatmul.mubr.f32.gmra.mrb[0].mxu0 %v386
        %v454 = vpop.f32.mrb[0].mxu0
        %v455 = vadd.f32 0.0, %v454
        %v456 = vpop.f32.mrb[0].mxu0
        %457 = vdwg.mxu0
        %v458 = vmax.f32 %v455, 0.0
        %v459 = vld [vmem:[%s2] sm:$0xf]
        %vm460 = vcmask 31744
        %v462 = vsel %vm460, %v458, 0
        %vm464 = vcmask 1043456
        %v466 = vsel %vm464, %v459, 0
        %468 = vmatprep.subr.mxu0 0.0
        %469 = vmatpush1.msra.mxu0 %v466
        %470 = vmatprep.subr.mxu0 0.0
        %471 = vmatpush1.msra.mxu0 0.0
        %472 = vmatprep.subr.mxu0 0.0
        %473 = vmatpush1.msra.mxu0 0.0
        %474 = vmatprep.subr.mxu0 0.0
        %475 = vmatpush1.msra.mxu0 0.0
        %476 = vmatprep.subr.mxu0 0.0
        %477 = vmatpush1.msra.mxu0 0.0
        %478 = vmatprep.subr.mxu0 0.0
        %479 = vmatpush1.msra.mxu0 0.0
        %480 = vmatprep.subr.mxu0 0.0
        %481 = vmatpush1.msra.mxu0 0.0
        %482 = vmatprep.subr.mxu0 0.0
        %483 = vmatpush1.msra.mxu0 0.0
        %484 = vmatprep.subr.mxu0 0.0
        %485 = vmatpush1.msra.mxu0 0.0
        %486 = vmatprep.subr.mxu0 0.0
        %487 = vmatpush1.msra.mxu0 0.0
        %488 = vmatprep.subr.mxu0 0.0
        %489 = vmatpush1.msra.mxu0 0.0
        %490 = vmatprep.subr.mxu0 0.0
        %491 = vmatpush1.msra.mxu0 0.0
        %492 = vmatprep.subr.mxu0 0.0
        %493 = vmatpush1.msra.mxu0 0.0
        %494 = vmatprep.subr.mxu0 0.0
        %495 = vmatpush1.msra.mxu0 0.0
        %496 = vmatprep.subr.mxu0 0.0
        %497 = vmatpush1.msra.mxu0 0.0
        %498 = vmatprep.subr.mxu0 0.0
        %499 = vmatpush1.msra.mxu0 0.0
        %500 = vmatprep.subr.mxu0 0.0
        %501 = vmatpush1.msra.mxu0 0.0
        %502 = vmatprep.subr.mxu0 0.0
        %503 = vmatpush1.msra.mxu0 0.0
        %504 = vmatprep.subr.mxu0 0.0
        %505 = vmatpush1.msra.mxu0 0.0
        %506 = vmatprep.subr.mxu0 0.0
        %507 = vmatpush1.msra.mxu0 0.0
        %508 = vmatprep.subr.mxu0 0.0
        %509 = vmatpush1.msra.mxu0 0.0
        %510 = vmatprep.subr.mxu0 0.0
        %511 = vmatpush1.msra.mxu0 0.0
        %512 = vmatprep.subr.mxu0 0.0
        %513 = vmatpush1.msra.mxu0 0.0
        %514 = vmatprep.subr.mxu0 0.0
        %515 = vmatpush1.msra.mxu0 0.0
        %516 = vmatprep.subr.mxu0 0.0
        %517 = vmatpush1.msra.mxu0 0.0
        %518 = vmatprep.subr.mxu0 0.0
        %519 = vmatpush1.msra.mxu0 0.0
        %520 = vmatprep.subr.mxu0 0.0
        %521 = vmatpush1.msra.mxu0 0.0
        %522 = vmatprep.subr.mxu0 0.0
        %523 = vmatpush1.msra.mxu0 0.0
        %524 = vmatprep.subr.mxu0 0.0
        %525 = vmatpush1.msra.mxu0 0.0
        %526 = vmatprep.subr.mxu0 0.0
        %527 = vmatpush1.msra.mxu0 0.0
        %528 = vmatprep.subr.mxu0 0.0
        %529 = vmatpush1.msra.mxu0 0.0
        %530 = vmatprep.subr.mxu0 0.0
        %531 = vmatpush1.msra.mxu0 0.0
        %532 = vmatprep.mubr.f32.mxu0 0.0
        %533 = vmatmul.mubr.f32.gmra.mrb[0].mxu0 %v462
        %v534 = vpop.f32.mrb[0].mxu0
        %v535 = vadd.f32 0.0, %v534
        %v536 = vpop.f32.mrb[0].mxu0
        %537 = vdwg.mxu0
        %v539 = vrot.slane %v535, 1
        %v541 = vadd.f32 %v535, %v539
        %v542 = vxor.u32 %v541, 2147483648
        %v543 = vmul.f32 %v542, 1.442695
        %v544 = vpow.pop %v543
        %v545 = vadd.f32 %v544, 1.0
        %v546 = vrcp.pop %v545
        %v547 = vmul.f32 1.0, %v546
        %v548 = vlaneseq
        %v549 = vshrl.u32 %v548, 7
        %v550 = vsub.s32 0, %v549
        %v551 = vrot.slane %v547, %v550
        %553 = vbcast.lane.b32.xlu0 %v551, 256
        %v554 = vpop.permute.xlu0 %553
        %s556 = sor.u32 256, 8
        %557 = vbcast.lane.b32.xlu0 %v551, %s556
        %v558 = vpop.permute.xlu0 %557
        %s560 = sor.u32 256, 16
        %561 = vbcast.lane.b32.xlu0 %v551, %s560
        %v562 = vpop.permute.xlu0 %561
        %s564 = sor.u32 256, 24
        %565 = vbcast.lane.b32.xlu0 %v551, %s564
        %v566 = vpop.permute.xlu0 %565
        %s568 = sor.u32 256, 32
        %569 = vbcast.lane.b32.xlu0 %v551, %s568
        %v570 = vpop.permute.xlu0 %569
        %s572 = sor.u32 256, 40
        %573 = vbcast.lane.b32.xlu0 %v551, %s572
        %v574 = vpop.permute.xlu0 %573
        %s576 = sor.u32 256, 48
        %577 = vbcast.lane.b32.xlu0 %v551, %s576
        %v578 = vpop.permute.xlu0 %577
        %s580 = sor.u32 256, 56
        %581 = vbcast.lane.b32.xlu0 %v551, %s580
        %v582 = vpop.permute.xlu0 %581
        %v583 = vmul.f32 %v189, %v554
        %v584 = vmul.f32 %v190, %v554
        %v585 = vmul.f32 %v191, %v558
        %v586 = vmul.f32 %v192, %v558
        %v587 = vmul.f32 %v193, %v562
        %v588 = vmul.f32 %v194, %v562
        %v589 = vmul.f32 %v195, %v566
        %v590 = vmul.f32 %v196, %v566
        %v591 = vmul.f32 %v197, %v570
        %v592 = vmul.f32 %v198, %v570
        %v593 = vmul.f32 %v199, %v574
        %v594 = vmul.f32 %v200, %v574
        %v595 = vmul.f32 %v201, %v578
        %v596 = vmul.f32 %v202, %v578
        %v597 = vmul.f32 %v203, %v582
        %v598 = vmul.f32 %v204, %v582
        %599 = vst [vmem:[%s188] sm:$0xff] %v583
        %600 = vst [vmem:[%s188 + $0x8] sm:$0xff] %v584
        %601 = vst [vmem:[%s188 + $0x10] sm:$0xff] %v585
        %602 = vst [vmem:[%s188 + $0x18] sm:$0xff] %v586
        %603 = vst [vmem:[%s188 + $0x20] sm:$0xff] %v587
        %604 = vst [vmem:[%s188 + $0x28] sm:$0xff] %v588
        %605 = vst [vmem:[%s188 + $0x30] sm:$0xff] %v589
        %606 = vst [vmem:[%s188 + $0x38] sm:$0xff] %v590
        %607 = vst [vmem:[%s188 + $0x40] sm:$0xff] %v591
        %608 = vst [vmem:[%s188 + $0x48] sm:$0xff] %v592
        %609 = vst [vmem:[%s188 + $0x50] sm:$0xff] %v593
        %610 = vst [vmem:[%s188 + $0x58] sm:$0xff] %v594
        %611 = vst [vmem:[%s188 + $0x60] sm:$0xff] %v595
        %612 = vst [vmem:[%s188 + $0x68] sm:$0xff] %v596
        %613 = vst [vmem:[%s188 + $0x70] sm:$0xff] %v597
        %614 = vst [vmem:[%s188 + $0x78] sm:$0xff] %v598
        %s615 = sand.u32 %s96, 1
        %s616 = scalar_lea.sflag [#allocation4], %s615
        %s617 = sand.u32 %s96, 1
        %s618 = smul.addr %s617, 128
        %s619 = scalar_lea.vmem [#allocation5], %s618
        // Predicated region
        $region37: #{tpu_custom_call.1} parent=31 // pred_check
          %p620 = pneg %p106
        $region38: #{tpu_custom_call.1} parent=31 // pred_check_branch
          %622 = sbr.rel (%p620) target = $region40
        $region39: #{tpu_custom_call.1} parent=31 // pred_region
          %s624 = ssub.s32 2048, 2048
          %625 = vsyncadd %s616, %s624
          %s626 = smul.addr %s20, 16
          %s627 = smul.addr %s626, 128
          %s628 = scalar_lea.hbm %s3, %s627
          %s629 = sshll.u32 %s619, 4
          %s630 = int_to_ptr.vmem [resolvable:$true] %s629
          %635 = dma.vmem_to_hbm [thread:$0]  %s630, 2048, %s628, %s616, 256, 256, 16
        $region40: #{tpu_custom_call.1} parent=31 // pred_fallthru
          _
      $region32: #{tpu_custom_call.1} parent=5 // pred_fallthru
        _
      %p636 = scmp.le.s32.totalorder 2, %s15
      // Predicated region
      $region41: #{tpu_custom_call.1} parent=5 // pred_check
        %p637 = pneg %p636
      $region42: #{tpu_custom_call.1} parent=5 // pred_check_branch
        %639 = sbr.rel (%p637) target = $region44
      $region43: #{tpu_custom_call.1} parent=5 // pred_region
        %s640 = ssub.s32 %s15, 2
        // Predicated region
        $region45: #{tpu_custom_call.1} parent=43 // pred_check
          %p641 = pneg %p112
        $region46: #{tpu_custom_call.1} parent=43 // pred_check_branch
          %643 = sbr.rel (%p641) target = $region48
        $region47: #{tpu_custom_call.1} parent=43 // pred_region
          %s644 = sand.u32 %s97, 1
          %s645 = scalar_lea.sflag [#allocation4], %s644
          %s646 = sand.u32 %s97, 1
          %s647 = smul.addr %s646, 128
          %s648 = scalar_lea.vmem [#allocation5], %s647
          %649 = dma.done %s645, 2048
        $region48: #{tpu_custom_call.1} parent=43 // pred_fallthru
          _
      $region44: #{tpu_custom_call.1} parent=5 // pred_fallthru
        _
    $region6: #{tpu_custom_call.1} parent=1 // loop_footer
      %s19 = sadd.s32 1, %s15
    $region7: #{tpu_custom_call.1} parent=1 // loop_footer_branch
      %14 = sbr.rel target = $region3
    $region8: #{tpu_custom_call.1} parent=1 // loop_exit
      _
    %650 = vsyncpa [#allocation3], 1
    %s651 = scalar_lea.sflag [#allocation3], 1
    %652 = vsyncpa %s651, 1
    %653 = vsyncpa [#allocation4], 1
    %s654 = scalar_lea.sflag [#allocation4], 1
    %655 = vsyncpa %s654, 1

</llo_original>
